<compile_context>
chip_gen: v7x
topology: tpu7x:2x2x1
jax: 0.10.0
libtpu: 0.0.40
codegen_flags: <defaults>
</compile_context>

<pallas_src>
import functools

import jax
import jax.numpy as jnp
from jax import lax
from jax.experimental import pallas as pl
from jax.experimental.pallas import tpu as pltpu


def nce_loss_kernel(x1_hbm_ref, x2_hbm_ref, out_ref,
                    x1_vmem, x2_vmem, copy_sem,
                    *, inv_temp, num_rows, block_rows):
    """One grid step processes `block_rows` rows of BOTH views.

    x1_hbm_ref / x2_hbm_ref : (d, D) bf16, HBM (memory_space=pl.ANY)
    out_ref                 : (1, 1)  f32, running scaled loss sum
    x1_vmem / x2_vmem       : (d, D) bf16 VMEM scratch (resident keys, 1 buffer)
    copy_sem                : DMA semaphores (2,)
    """
    tile = pl.program_id(0)

    @pl.when(tile == 0)
    def _prologue():
        out_ref[...] = jnp.zeros_like(out_ref)
        cp1 = pltpu.make_async_copy(x1_hbm_ref, x1_vmem, copy_sem.at[0])
        cp2 = pltpu.make_async_copy(x2_hbm_ref, x2_vmem, copy_sem.at[1])
        cp1.start()
        cp2.start()
        cp1.wait()
        cp2.wait()

    row0 = pl.multiple_of(tile * block_rows, block_rows)
    x1t = x1_vmem[pl.ds(row0, block_rows), :]      # (block_rows, D) bf16
    x2t = x2_vmem[pl.ds(row0, block_rows), :]
    x1f = x1_vmem[...]                             # (d, D) bf16, resident
    x2f = x2_vmem[...]

    # Contract feature dims of both operands -> A @ B.T with no transpose.
    dn = (((1,), (1,)), ((), ()))
    scale = jnp.float32(inv_temp)
    s12 = lax.dot_general(x1t, x2f, dn, preferred_element_type=jnp.float32) * scale
    s11 = lax.dot_general(x1t, x1f, dn, preferred_element_type=jnp.float32) * scale
    s22 = lax.dot_general(x2t, x2f, dn, preferred_element_type=jnp.float32) * scale
    s21 = lax.dot_general(x2t, x1f, dn, preferred_element_type=jnp.float32) * scale

    # Global-diagonal mask for this row tile (masks self-similarity).
    cols = lax.broadcasted_iota(jnp.int32, (block_rows, num_rows), 1)
    rows = lax.broadcasted_iota(jnp.int32, (block_rows, num_rows), 0) \
        + tile * block_rows
    diag = rows == cols

    neg_inf = jnp.float32(-jnp.inf)
    s11m = jnp.where(diag, neg_inf, s11)
    s22m = jnp.where(diag, neg_inf, s22)

    # Target logit sim12[i, i], computed directly from the row tiles
    # (O(block_rows*D) instead of masking + reducing the full sim12 tile).
    diag12 = jnp.sum(x1t.astype(jnp.float32) * x2t.astype(jnp.float32),
                     axis=-1, keepdims=True) * scale          # (block_rows, 1)

    # Rows i (< d): logits row = [sim12[i,:], masked sim11[i,:]]
    m1 = jnp.maximum(jnp.max(s12, axis=-1, keepdims=True),
                     jnp.max(s11m, axis=-1, keepdims=True))
    z1 = (jnp.sum(jnp.exp(s12 - m1), axis=-1, keepdims=True)
          + jnp.sum(jnp.exp(s11m - m1), axis=-1, keepdims=True))
    lse1 = m1 + jnp.log(z1)

    # Rows d+j: logits row = [masked sim22[j,:], sim12[:,j]] (== s21 row j)
    m2 = jnp.maximum(jnp.max(s22m, axis=-1, keepdims=True),
                     jnp.max(s21, axis=-1, keepdims=True))
    z2 = (jnp.sum(jnp.exp(s22m - m2), axis=-1, keepdims=True)
          + jnp.sum(jnp.exp(s21 - m2), axis=-1, keepdims=True))
    lse2 = m2 + jnp.log(z2)

    partial = jnp.sum((lse1 - diag12) + (lse2 - diag12), keepdims=True)  # (1,1)
    out_ref[...] += partial * jnp.float32(1.0 / (2.0 * num_rows))


def nce_loss(batch_sample_one, batch_sample_two, temperature, *, block_rows=None):
    """Pallas NCE loss. Inputs: (d, D) embeddings, Python scalar temperature."""
    # bf16 MXU operands; all epilogue math stays f32 inside the kernel.
    x1 = batch_sample_one.astype(jnp.bfloat16)
    x2 = batch_sample_two.astype(jnp.bfloat16)
    d, D = x1.shape
    assert x2.shape == (d, D)

    if block_rows is None:
        if d > 256 and d % 256 == 0:
            block_rows = 256          # fills the 256-wide MXU on v6e/v7x
        elif d > 128 and d % 128 == 0:
            block_rows = 128
        else:
            block_rows = d
    assert d % block_rows == 0
    # bf16 packs 2 rows / sublane -> keep row-tile offsets 16-aligned.
    assert block_rows == d or block_rows % 16 == 0
    num_tiles = d // block_rows

    kernel = functools.partial(
        nce_loss_kernel,
        inv_temp=1.0 / float(temperature),
        num_rows=d,
        block_rows=block_rows,
    )

    # Explicit VMEM budget: single-buffered bf16 keys + four f32 sim tiles
    # + exp temporaries, with headroom; cap at 64 MiB (v7x physical VMEM).
    key_bytes = 2 * d * D * 2
    sim_bytes = 4 * block_rows * d * 4
    tmp_bytes = 4 * block_rows * d * 4
    vmem_limit = int(min(64 * 1024 * 1024,
                         max(32 * 1024 * 1024,
                             2 * (key_bytes + sim_bytes + tmp_bytes))))

    out = pl.pallas_call(
        kernel,
        out_shape=jax.ShapeDtypeStruct((1, 1), jnp.float32),
        grid=(num_tiles,),
        in_specs=[
            pl.BlockSpec(memory_space=pl.ANY),   # x1 stays in HBM; DMA'd once
            pl.BlockSpec(memory_space=pl.ANY),   # x2 stays in HBM; DMA'd once
        ],
        out_specs=pl.BlockSpec((1, 1), lambda i: (0, 0)),   # resident accumulator
        scratch_shapes=[
            pltpu.VMEM((d, D), jnp.bfloat16),    # x1 keys, single buffer
            pltpu.VMEM((d, D), jnp.bfloat16),    # x2 keys, single buffer
            pltpu.SemaphoreType.DMA((2,)),
        ],
        compiler_params=pltpu.CompilerParams(
            dimension_semantics=("arbitrary",),  # output block accumulates
            vmem_limit_bytes=vmem_limit,
        ),
    )(x1, x2)
    return out[0, 0]


# ---------------- pure-JAX reference (mirrors the PyTorch code) ------------
def reference_nce_loss(x1, x2, temperature):
    d = x1.shape[0]
    sim11 = x1 @ x1.T / temperature
    sim22 = x2 @ x2.T / temperature
    sim12 = x1 @ x2.T / temperature
    eye = jnp.eye(d, dtype=bool)
    sim11 = jnp.where(eye, -jnp.inf, sim11)
    sim22 = jnp.where(eye, -jnp.inf, sim22)
    raw1 = jnp.concatenate([sim12, sim11], axis=-1)
    raw2 = jnp.concatenate([sim22, sim12.T], axis=-1)
    logits = jnp.concatenate([raw1, raw2], axis=-2)          # (2d, 2d)
    labels = jnp.arange(2 * d)
    logprobs = jax.nn.log_softmax(logits, axis=-1)
    return -jnp.mean(logprobs[jnp.arange(2 * d), labels])


if __name__ == "__main__":
    d, D = 32, 64          # small test shapes (batch of samples, embedding dim)
    temperature = 0.5

    key = jax.random.PRNGKey(0)
    k1, k2 = jax.random.split(key)
    x1 = jax.random.normal(k1, (d, D), dtype=jnp.float32)
    x2 = jax.random.normal(k2, (d, D), dtype=jnp.float32)

    # block_rows=16 -> grid=(2,) so the cross-tile accumulation path and the
    # one-time key DMA + resident reuse are both exercised.
    loss = nce_loss(x1, x2, temperature, block_rows=16)
    loss = jax.block_until_ready(loss)

    # Tight check against a reference run on the same bf16-rounded inputs
    # (isolates kernel logic from the deliberate bf16 operand cast) ...
    x1b = x1.astype(jnp.bfloat16).astype(jnp.float32)
    x2b = x2.astype(jnp.bfloat16).astype(jnp.float32)
    ref_bf16 = reference_nce_loss(x1b, x2b, temperature)
    # ... and a looser sanity check against the full-f32 reference.
    ref_f32 = reference_nce_loss(x1, x2, temperature)

    assert loss.shape == ()
    assert jnp.isfinite(loss)
    assert jnp.allclose(loss, ref_bf16, atol=2e-3, rtol=2e-3), \
        f"kernel {loss} vs bf16-input ref {ref_bf16}"
    assert jnp.allclose(loss, ref_f32, atol=5e-2, rtol=5e-2), \
        f"kernel {loss} vs f32 ref {ref_f32}"

    print("KERNEL_OK")
</pallas_src>

<mosaic_0001>
module attributes {stable_mosaic.version = 11 : i64} {
  func.func @nce_loss_kernel(%arg0: i32, %arg1: memref<32x64xbf16, #tpu.memory_space<any>>, %arg2: memref<32x64xbf16, #tpu.memory_space<any>>, %arg3: memref<1x1xf32, #tpu.memory_space<vmem>>, %arg4: memref<32x64xbf16, #tpu.memory_space<vmem>>, %arg5: memref<32x64xbf16, #tpu.memory_space<vmem>>, %arg6: memref<2x!tpu.dma_semaphore, #tpu.memory_space<semaphore_mem>>) attributes {dimension_semantics = [#tpu.dimension_semantics<arbitrary>], iteration_bounds = array<i64: 2>, scalar_prefetch = 0 : i64, scratch_operands = 3 : i64, tpu.core_type = #tpu.core_type<tc>, window_params = [{}, {}, {pipeline_mode = #tpu.pipeline_mode<synchronous>, transform_indices = @transform_2, window_bounds = array<i64: 1, 1>}]} {
    %c0_i32 = arith.constant 0 : i32
    %0 = arith.cmpi eq, %arg0, %c0_i32 : i32
    %1 = arith.extui %0 : i1 to i32
    %c0_i32_0 = arith.constant 0 : i32
    %2 = arith.cmpi ne, %1, %c0_i32_0 : i32
    scf.if %2 {
      %cst_32 = arith.constant 0.000000e+00 : f32
      %89 = vector.broadcast %cst_32 : f32 to vector<1x1xf32>
      %c0_33 = arith.constant 0 : index
      %c0_34 = arith.constant 0 : index
      %90 = vector.load %arg3[%c0_33, %c0_34] : memref<1x1xf32, #tpu.memory_space<vmem>>, vector<1x1xf32>
      tpu.vector_store %arg3[%c0_33, %c0_34], %89 {strides = array<i32>} : memref<1x1xf32, #tpu.memory_space<vmem>>, vector<1x1xf32>,
      %c0_i32_35 = arith.constant 0 : i32
      %91 = tpu.memref_slice %arg6[%c0_i32_35] : memref<2x!tpu.dma_semaphore, #tpu.memory_space<semaphore_mem>> -> memref<1x!tpu.dma_semaphore, #tpu.memory_space<semaphore_mem>>
      %92 = tpu.memref_squeeze %91 : memref<1x!tpu.dma_semaphore, #tpu.memory_space<semaphore_mem>> -> memref<!tpu.dma_semaphore, #tpu.memory_space<semaphore_mem>>
      tpu.enqueue_dma source(%arg1 : memref<32x64xbf16, #tpu.memory_space<any>>) target(%arg4 : memref<32x64xbf16, #tpu.memory_space<vmem>>) target_semaphore(%92 : memref<!tpu.dma_semaphore, #tpu.memory_space<semaphore_mem>>)
      %c1_i32 = arith.constant 1 : i32
      %93 = tpu.memref_slice %arg6[%c1_i32] : memref<2x!tpu.dma_semaphore, #tpu.memory_space<semaphore_mem>> -> memref<1x!tpu.dma_semaphore, #tpu.memory_space<semaphore_mem>>
      %94 = tpu.memref_squeeze %93 : memref<1x!tpu.dma_semaphore, #tpu.memory_space<semaphore_mem>> -> memref<!tpu.dma_semaphore, #tpu.memory_space<semaphore_mem>>
      tpu.enqueue_dma source(%arg2 : memref<32x64xbf16, #tpu.memory_space<any>>) target(%arg5 : memref<32x64xbf16, #tpu.memory_space<vmem>>) target_semaphore(%94 : memref<!tpu.dma_semaphore, #tpu.memory_space<semaphore_mem>>)
      %c0_i32_36 = arith.constant 0 : i32
      %95 = tpu.memref_slice %arg6[%c0_i32_36] : memref<2x!tpu.dma_semaphore, #tpu.memory_space<semaphore_mem>> -> memref<1x!tpu.dma_semaphore, #tpu.memory_space<semaphore_mem>>
      %96 = tpu.memref_squeeze %95 : memref<1x!tpu.dma_semaphore, #tpu.memory_space<semaphore_mem>> -> memref<!tpu.dma_semaphore, #tpu.memory_space<semaphore_mem>>
      tpu.wait_dma2 semaphore(%96 : memref<!tpu.dma_semaphore, #tpu.memory_space<semaphore_mem>>) src(%arg1 : memref<32x64xbf16, #tpu.memory_space<any>>) dst(%arg4 : memref<32x64xbf16, #tpu.memory_space<vmem>>)
      %c1_i32_37 = arith.constant 1 : i32
      %97 = tpu.memref_slice %arg6[%c1_i32_37] : memref<2x!tpu.dma_semaphore, #tpu.memory_space<semaphore_mem>> -> memref<1x!tpu.dma_semaphore, #tpu.memory_space<semaphore_mem>>
      %98 = tpu.memref_squeeze %97 : memref<1x!tpu.dma_semaphore, #tpu.memory_space<semaphore_mem>> -> memref<!tpu.dma_semaphore, #tpu.memory_space<semaphore_mem>>
      tpu.wait_dma2 semaphore(%98 : memref<!tpu.dma_semaphore, #tpu.memory_space<semaphore_mem>>) src(%arg2 : memref<32x64xbf16, #tpu.memory_space<any>>) dst(%arg5 : memref<32x64xbf16, #tpu.memory_space<vmem>>)
    } else {
    }
    %c16_i32 = arith.constant 16 : i32
    %3 = arith.muli %arg0, %c16_i32 : i32
    %4 = tpu.assume_multiple %3, 16 : i32
    %5 = arith.index_cast %4 : i32 to index
    %c0 = arith.constant 0 : index
    %6 = vector.load %arg4[%5, %c0] : memref<32x64xbf16, #tpu.memory_space<vmem>>, vector<16x64xbf16>
    %7 = arith.index_cast %4 : i32 to index
    %c0_1 = arith.constant 0 : index
    %8 = vector.load %arg5[%7, %c0_1] : memref<32x64xbf16, #tpu.memory_space<vmem>>, vector<16x64xbf16>
    %c0_2 = arith.constant 0 : index
    %c0_3 = arith.constant 0 : index
    %9 = vector.load %arg4[%c0_2, %c0_3] : memref<32x64xbf16, #tpu.memory_space<vmem>>, vector<32x64xbf16>
    %c0_4 = arith.constant 0 : index
    %c0_5 = arith.constant 0 : index
    %10 = vector.load %arg5[%c0_4, %c0_5] : memref<32x64xbf16, #tpu.memory_space<vmem>>, vector<32x64xbf16>
    %cst = arith.constant dense<0.000000e+00> : vector<16x32xf32>
    %11 = tpu.matmul %6, %10, %cst {dimension_numbers = #tpu.dot_dimension_numbers<[1], [1], [0], [0], [0, 0, 1, 0], [], []>} : vector<16x64xbf16>, vector<32x64xbf16>, vector<16x32xf32> -> vector<16x32xf32>
    %cst_6 = arith.constant 2.000000e+00 : f32
    %12 = vector.broadcast %cst_6 : f32 to vector<16x32xf32>
    %13 = arith.mulf %11, %12 : vector<16x32xf32>
    %cst_7 = arith.constant dense<0.000000e+00> : vector<16x32xf32>
    %14 = tpu.matmul %6, %9, %cst_7 {dimension_numbers = #tpu.dot_dimension_numbers<[1], [1], [0], [0], [0, 0, 1, 0], [], []>} : vector<16x64xbf16>, vector<32x64xbf16>, vector<16x32xf32> -> vector<16x32xf32>
    %cst_8 = arith.constant 2.000000e+00 : f32
    %15 = vector.broadcast %cst_8 : f32 to vector<16x32xf32>
    %16 = arith.mulf %14, %15 : vector<16x32xf32>
    %cst_9 = arith.constant dense<0.000000e+00> : vector<16x32xf32>
    %17 = tpu.matmul %8, %10, %cst_9 {dimension_numbers = #tpu.dot_dimension_numbers<[1], [1], [0], [0], [0, 0, 1, 0], [], []>} : vector<16x64xbf16>, vector<32x64xbf16>, vector<16x32xf32> -> vector<16x32xf32>
    %cst_10 = arith.constant 2.000000e+00 : f32
    %18 = vector.broadcast %cst_10 : f32 to vector<16x32xf32>
    %19 = arith.mulf %17, %18 : vector<16x32xf32>
    %cst_11 = arith.constant dense<0.000000e+00> : vector<16x32xf32>
    %20 = tpu.matmul %8, %9, %cst_11 {dimension_numbers = #tpu.dot_dimension_numbers<[1], [1], [0], [0], [0, 0, 1, 0], [], []>} : vector<16x64xbf16>, vector<32x64xbf16>, vector<16x32xf32> -> vector<16x32xf32>
    %cst_12 = arith.constant 2.000000e+00 : f32
    %21 = vector.broadcast %cst_12 : f32 to vector<16x32xf32>
    %22 = arith.mulf %20, %21 : vector<16x32xf32>
    %23 = tpu.iota {dimensions = array<i32: 1>} : vector<16x32xi32>
    %24 = tpu.iota {dimensions = array<i32: 0>} : vector<16x32xi32>
    %c16_i32_13 = arith.constant 16 : i32
    %25 = arith.muli %arg0, %c16_i32_13 : i32
    %26 = vector.broadcast %25 : i32 to vector<16x32xi32>
    %27 = arith.addi %24, %26 : vector<16x32xi32>
    %28 = arith.cmpi eq, %27, %23 : vector<16x32xi32>
    %cst_14 = arith.constant 0xFF800000 : f32
    %29 = vector.broadcast %cst_14 : f32 to vector<16x32xf32>
    %30 = arith.select %28, %29, %16 : vector<16x32xi1>, vector<16x32xf32>
    %cst_15 = arith.constant 0xFF800000 : f32
    %31 = vector.broadcast %cst_15 : f32 to vector<16x32xf32>
    %32 = arith.select %28, %31, %19 : vector<16x32xi1>, vector<16x32xf32>
    %33 = arith.extf %6 : vector<16x64xbf16> to vector<16x64xf32>
    %34 = arith.extf %8 : vector<16x64xbf16> to vector<16x64xf32>
    %35 = arith.mulf %33, %34 : vector<16x64xf32>
    %cst_16 = arith.constant dense<0.000000e+00> : vector<16xf32>
    %36 = vector.multi_reduction <add>, %35, %cst_16 [1] : vector<16x64xf32> to vector<16xf32>
    %37 = vector.shape_cast %36 : vector<16xf32> to vector<16x1xf32>
    %cst_17 = arith.constant 2.000000e+00 : f32
    %38 = vector.broadcast %cst_17 : f32 to vector<16x1xf32>
    %39 = arith.mulf %37, %38 : vector<16x1xf32>
    %cst_18 = arith.constant dense<0xFF800000> : vector<16xf32>
    %40 = vector.multi_reduction <maximumf>, %13, %cst_18 [1] : vector<16x32xf32> to vector<16xf32>
    %41 = vector.shape_cast %40 : vector<16xf32> to vector<16x1xf32>
    %cst_19 = arith.constant dense<0xFF800000> : vector<16xf32>
    %42 = vector.multi_reduction <maximumf>, %30, %cst_19 [1] : vector<16x32xf32> to vector<16xf32>
    %43 = vector.shape_cast %42 : vector<16xf32> to vector<16x1xf32>
    %44 = arith.maximumf %41, %43 : vector<16x1xf32>
    %45 = vector.broadcast %44 : vector<16x1xf32> to vector<16x32xf32>
    %46 = arith.subf %13, %45 : vector<16x32xf32>
    %47 = math.exp %46 : vector<16x32xf32>
    %cst_20 = arith.constant dense<0.000000e+00> : vector<16xf32>
    %48 = vector.multi_reduction <add>, %47, %cst_20 [1] : vector<16x32xf32> to vector<16xf32>
    %49 = vector.shape_cast %48 : vector<16xf32> to vector<16x1xf32>
    %50 = vector.broadcast %44 : vector<16x1xf32> to vector<16x32xf32>
    %51 = arith.subf %30, %50 : vector<16x32xf32>
    %52 = math.exp %51 : vector<16x32xf32>
    %cst_21 = arith.constant dense<0.000000e+00> : vector<16xf32>
    %53 = vector.multi_reduction <add>, %52, %cst_21 [1] : vector<16x32xf32> to vector<16xf32>
    %54 = vector.shape_cast %53 : vector<16xf32> to vector<16x1xf32>
    %55 = arith.addf %49, %54 : vector<16x1xf32>
    %56 = math.log %55 : vector<16x1xf32>
    %57 = arith.addf %44, %56 : vector<16x1xf32>
    %cst_22 = arith.constant dense<0xFF800000> : vector<16xf32>
    %58 = vector.multi_reduction <maximumf>, %32, %cst_22 [1] : vector<16x32xf32> to vector<16xf32>
    %59 = vector.shape_cast %58 : vector<16xf32> to vector<16x1xf32>
    %cst_23 = arith.constant dense<0xFF800000> : vector<16xf32>
    %60 = vector.multi_reduction <maximumf>, %22, %cst_23 [1] : vector<16x32xf32> to vector<16xf32>
    %61 = vector.shape_cast %60 : vector<16xf32> to vector<16x1xf32>
    %62 = arith.maximumf %59, %61 : vector<16x1xf32>
    %63 = vector.broadcast %62 : vector<16x1xf32> to vector<16x32xf32>
    %64 = arith.subf %32, %63 : vector<16x32xf32>
    %65 = math.exp %64 : vector<16x32xf32>
    %cst_24 = arith.constant dense<0.000000e+00> : vector<16xf32>
    %66 = vector.multi_reduction <add>, %65, %cst_24 [1] : vector<16x32xf32> to vector<16xf32>
    %67 = vector.shape_cast %66 : vector<16xf32> to vector<16x1xf32>
    %68 = vector.broadcast %62 : vector<16x1xf32> to vector<16x32xf32>
    %69 = arith.subf %22, %68 : vector<16x32xf32>
    %70 = math.exp %69 : vector<16x32xf32>
    %cst_25 = arith.constant dense<0.000000e+00> : vector<16xf32>
    %71 = vector.multi_reduction <add>, %70, %cst_25 [1] : vector<16x32xf32> to vector<16xf32>
    %72 = vector.shape_cast %71 : vector<16xf32> to vector<16x1xf32>
    %73 = arith.addf %67, %72 : vector<16x1xf32>
    %74 = math.log %73 : vector<16x1xf32>
    %75 = arith.addf %62, %74 : vector<16x1xf32>
    %76 = arith.subf %57, %39 : vector<16x1xf32>
    %77 = arith.subf %75, %39 : vector<16x1xf32>
    %78 = arith.addf %76, %77 : vector<16x1xf32>
    %79 = vector.shape_cast %78 : vector<16x1xf32> to vector<1x16x1xf32>
    %cst_26 = arith.constant dense<0.000000e+00> : vector<1xf32>
    %80 = vector.multi_reduction <add>, %79, %cst_26 [1, 2] : vector<1x16x1xf32> to vector<1xf32>
    %81 = vector.shape_cast %80 : vector<1xf32> to vector<1x1x1xf32>
    %82 = vector.extract %81[0, 0, 0] : f32 from vector<1x1x1xf32>
    %83 = vector.broadcast %82 : f32 to vector<1x1xf32>
    %c0_27 = arith.constant 0 : index
    %c0_28 = arith.constant 0 : index
    %84 = vector.load %arg3[%c0_27, %c0_28] : memref<1x1xf32, #tpu.memory_space<vmem>>, vector<1x1xf32>
    %cst_29 = arith.constant 1.562500e-02 : f32
    %85 = vector.broadcast %cst_29 : f32 to vector<1x1xf32>
    %86 = arith.mulf %83, %85 : vector<1x1xf32>
    %87 = arith.addf %84, %86 : vector<1x1xf32>
    %c0_30 = arith.constant 0 : index
    %c0_31 = arith.constant 0 : index
    %88 = vector.load %arg3[%c0_30, %c0_31] : memref<1x1xf32, #tpu.memory_space<vmem>>, vector<1x1xf32>
    tpu.vector_store %arg3[%c0_30, %c0_31], %87 {strides = array<i32>} : memref<1x1xf32, #tpu.memory_space<vmem>>, vector<1x1xf32>,
    return
  }
  func.func @transform_2(%arg0: i32) -> (i32, i32) {
    %c0_i32 = arith.constant 0 : i32
    %c0_i32_0 = arith.constant 0 : i32
    %c0_i32_1 = arith.constant 0 : i32
    return %c0_i32, %c0_i32_0 : i32, i32
  }
}

</mosaic_0001>

<llo_original>
// kernel: tpu_custom_call.1
$region0: #{tpu_custom_call.1}
  #allocation0 [shape = 'u32[]', space=smem, size = 0x4, offset = 0x4, fixed_abs, tag = 'smem constant byte address 0x4 - core index']
  #allocation1 [shape = 'u32[144,128]{1,0:T(1,128)}', space=vmem, size = 0x12000, scoped, tag = 'internal scratch']
  #allocation2 [shape = 'bf16[32,64]{1,0:T(16,128)(2,1)}', space=vmem, size = 0x2000, scoped, tag = 'scratch operand']
  #allocation3 [shape = 'bf16[32,64]{1,0:T(16,128)(2,1)}', space=vmem, size = 0x2000, scoped, tag = 'scratch operand']
  #allocation4 [shape = 's32[2]{0}', space=sflag, size = 0x8, scoped, tag = 'scratch operand']
  #allocation7 [shape = 's32[]', space=sflag, size = 0x4, offset = 0, fixed_abs, tag = 'sflag constant byte address 0x0 - dummy sync flag']
  #allocation8 [shape = 's32[]', space=sflag, size = 0x4, offset = 0, fixed_abs, tag = 'sflag constant byte address 0x0 - dummy sync flag']
  #allocation9 [shape = 'u32[]', space=smem, size = 0x4, offset = 0x44, fixed_abs, tag = 'smem constant byte address 0x44 - assertion arg 0']
  #allocation10 [shape = 'u32[]', space=smem, size = 0x4, offset = 0x48, fixed_abs, tag = 'smem constant byte address 0x48 - assertion arg 1']
  #allocation11 [shape = 's32[]', space=sflag, size = 0x4, offset = 0, fixed_abs, tag = 'sflag constant byte address 0x0 - dummy sync flag']
  #allocation12 [shape = 's32[]', space=sflag, size = 0x4, offset = 0, fixed_abs, tag = 'sflag constant byte address 0x0 - dummy sync flag']
  %s0 = inlined_call_operand.hbm [shape: bf16[32,64], index: 0, kind: input, shape index: {}]
  %s1 = inlined_call_operand.hbm [shape: bf16[32,64], index: 1, kind: input, shape index: {}]
  %s2 = inlined_call_operand.hbm [shape: f32[1,1], index: 2, kind: output, shape index: {}]
  %s3 = sld [smem:[#allocation0]]
  $region37: #{tpu_custom_call.1} parent=0
    _
  %s5 = ssub.s32 1, %s3
  %s6 = scalar_select 0, %s5, %s3
  $region1: #{tpu_custom_call.1} parent=0
    #allocation5 [shape = 'u8[512]{0}', space=vmem, size = 0x400, scoped, tag = 'output window, operand 0, single buffered']
    #allocation6 [shape = 's32[2]{0}', space=sflag, size = 0x8, scoped, tag = 'scoped memory for tpu_custom_call.1']
    %7 = vsyncpa [#allocation6], 0
    loop: start=0, step=1, limit=3
    $region2: #{tpu_custom_call.1} parent=1 // loop_pre_header
      _
    $region3: #{tpu_custom_call.1} parent=1 // loop_header
      %s9 = sphi 0, %s13
      %p10 = scmp.ge.s32.totalorder %s9, 3
      %s16 = sphi 0, %s16
      %s18 = sphi 0, %s16
      %s26 = sphi 0, %s18
    $region4: #{tpu_custom_call.1} parent=1 // loop_header_branch
      %12 = sbr.rel (%p10) target = $region8
    $region5: #{tpu_custom_call.1} parent=1 // loop_body
      %s14 = ssub.s32 %s9, 1
      %s15 = sadd.s32 %s9, 1
      %s17 = sadd.s32 %s16, 1
      %p19 = scmp.eq.s32.totalorder %s9, 1
      %p20 = scmp.ne.s32.totalorder %s16, %s18
      %p21 = scmp.eq.s32.totalorder %s9, 0
      %p22 = por %p20, %p21
      %p23 = scmp.ne.s32.totalorder %s16, %s18
      %p24 = scmp.eq.s32.totalorder %s14, 1
      %p25 = por %p23, %p24
      %p27 = scmp.ne.s32.totalorder %s18, %s26
      %p28 = scmp.eq.s32.totalorder %s14, 0
      %p29 = por %p27, %p28
      %p30 = scmp.lt.s32.totalorder %s9, 2
      // Predicated region
      $region9: #{tpu_custom_call.1} parent=5 // pred_check
        %p31 = pneg %p30
      $region10: #{tpu_custom_call.1} parent=5 // pred_check_branch
        %33 = sbr.rel (%p31) target = $region12
      $region11: #{tpu_custom_call.1} parent=5 // pred_region
        %p34 = pneg %p22
        %p35 = pneg %p19
        %p37 = scmp.eq.s32.totalorder %s9, 0
        // Predicated region
        $region13: #{tpu_custom_call.1} parent=11 // pred_check
          %p38 = pneg %p37
        $region14: #{tpu_custom_call.1} parent=11 // pred_check_branch
          %40 = sbr.rel (%p38) target = $region16
        $region15: #{tpu_custom_call.1} parent=11 // pred_region
          %vm41 = vcmask 0
          %42 = vst.msk [vmem:[#allocation5] sm:$0x1] %vm41, 0.0
          // Predicated region
          $region17: #{tpu_custom_call.1} parent=15 // pred_check
            _
          $region18: #{tpu_custom_call.1} parent=15 // pred_check_branch
            %44 = sbr.rel target = $region20
          $region19: #{tpu_custom_call.1} parent=15 // pred_region
            %45 = sst [smem:[#allocation9]] [#allocation8]
            %46 = sst [smem:[#allocation10]] [#allocation7]
          $region20: #{tpu_custom_call.1} parent=15 // pred_fallthru
            _
          %48 = shalt.err (0)
          %s50 = sshll.u32 [#allocation2], 4
          %s51 = int_to_ptr.vmem [resolvable:$true] %s50
          %53 = dma.hbm_to_vmem [thread:$0]  %s0, 256, %s51, [#allocation4]
          %s54 = scalar_lea.sflag [#allocation4], 1
          // Predicated region
          $region21: #{tpu_custom_call.1} parent=15 // pred_check
            _
          $region22: #{tpu_custom_call.1} parent=15 // pred_check_branch
            %56 = sbr.rel target = $region24
          $region23: #{tpu_custom_call.1} parent=15 // pred_region
            %57 = sst [smem:[#allocation9]] [#allocation12]
            %58 = sst [smem:[#allocation10]] [#allocation11]
          $region24: #{tpu_custom_call.1} parent=15 // pred_fallthru
            _
          %60 = shalt.err (0)
          %s62 = sshll.u32 [#allocation3], 4
          %s63 = int_to_ptr.vmem [resolvable:$true] %s62
          %65 = dma.hbm_to_vmem [thread:$0]  %s1, 256, %s63, %s54
          %s66 = smul.u32 4, 4
          %s67 = smul.u32 %s66, 1
          %s68 = sshll.u32 %s67, 4
          %69 = dma.done [#allocation4], %s68
          %s70 = sshll.u32 %s67, 4
          %71 = dma.done %s54, %s70
        $region16: #{tpu_custom_call.1} parent=11 // pred_fallthru
          _
        %s72 = smul.u32 %s9, 16
        %s73 = sshra.s32 %s72, 4
        %s74 = sand.u32 %s72, 15
        %s75 = smul.addr %s73, 8
        %s76 = scalar_lea.vmem [#allocation2], %s75
        %v77 = vld [vmem:[%s76] sm:$0xff]
        %s78 = smul.addr %s73, 8
        %s79 = scalar_lea.vmem [#allocation3], %s78
        %v80 = vld [vmem:[%s79] sm:$0xff]
        %v81 = vld [vmem:[#allocation2] sm:$0xff]
        %v82 = vld [vmem:[#allocation2 + $0x8] sm:$0xff]
        %v83 = vld [vmem:[#allocation3] sm:$0xff]
        %v84 = vld [vmem:[#allocation3 + $0x8] sm:$0xff]
        %vm85 = vcmask 523264
        %v87 = vsel %vm85, %v77, 0
        %v90 = vsel %vm85, %v83, 0
        %v93 = vsel %vm85, %v84, 0
        %95 = vmatprep.subr.bf16.mxu0 0
        %96 = vmatpush1.bf16.xpose.msra.mxu0 %v90
        %97 = vmatprep.subr.bf16.mxu0 0
        %98 = vmatpush1.bf16.xpose.msra.mxu0 %v93
        %99 = vmatprep.subr.bf16.mxu0 0
        %100 = vmatpush1.bf16.xpose.msra.mxu0 0
        %101 = vmatprep.subr.bf16.mxu0 0
        %102 = vmatpush1.bf16.xpose.msra.mxu0 0
        %103 = vmatprep.subr.bf16.mxu0 0
        %104 = vmatpush1.bf16.xpose.msra.mxu0 0
        %105 = vmatprep.subr.bf16.mxu0 0
        %106 = vmatpush1.bf16.xpose.msra.mxu0 0
        %107 = vmatprep.subr.bf16.mxu0 0
        %108 = vmatpush1.bf16.xpose.msra.mxu0 0
        %109 = vmatprep.subr.bf16.mxu0 0
        %110 = vmatpush1.bf16.xpose.msra.mxu0 0
        %111 = vmatprep.subr.bf16.mxu0 0
        %112 = vmatpush1.bf16.xpose.msra.mxu0 0
        %113 = vmatprep.subr.bf16.mxu0 0
        %114 = vmatpush1.bf16.xpose.msra.mxu0 0
        %115 = vmatprep.subr.bf16.mxu0 0
        %116 = vmatpush1.bf16.xpose.msra.mxu0 0
        %117 = vmatprep.subr.bf16.mxu0 0
        %118 = vmatpush1.bf16.xpose.msra.mxu0 0
        %119 = vmatprep.subr.bf16.mxu0 0
        %120 = vmatpush1.bf16.xpose.msra.mxu0 0
        %121 = vmatprep.subr.bf16.mxu0 0
        %122 = vmatpush1.bf16.xpose.msra.mxu0 0
        %123 = vmatprep.subr.bf16.mxu0 0
        %124 = vmatpush1.bf16.xpose.msra.mxu0 0
        %125 = vmatprep.subr.bf16.mxu0 0
        %126 = vmatpush1.bf16.xpose.msra.mxu0 0
        %127 = vmatprep.mubr.bf16.mxu0 0
        %128 = vmatmul.mubr.bf16.gmra.mrb[0].mxu0 %v87
        %v129 = vpop.f32.mrb[0].mxu0
        %v130 = vadd.f32 0.0, %v129
        %v131 = vpop.f32.mrb[0].mxu0
        %v132 = vpop.f32.mrb[0].mxu0
        %v133 = vadd.f32 0.0, %v132
        %v134 = vpop.f32.mrb[0].mxu0
        %135 = vdwg.mxu0
        %v136 = vmul.f32 %v130, 2.0
        %v137 = vmul.f32 %v133, 2.0
        %v139 = vsel %vm85, %v81, 0
        %v142 = vsel %vm85, %v82, 0
        %144 = vmatprep.subr.bf16.mxu0 0
        %145 = vmatpush1.bf16.xpose.msra.mxu0 %v139
        %146 = vmatprep.subr.bf16.mxu0 0
        %147 = vmatpush1.bf16.xpose.msra.mxu0 %v142
        %148 = vmatprep.subr.bf16.mxu0 0
        %149 = vmatpush1.bf16.xpose.msra.mxu0 0
        %150 = vmatprep.subr.bf16.mxu0 0
        %151 = vmatpush1.bf16.xpose.msra.mxu0 0
        %152 = vmatprep.subr.bf16.mxu0 0
        %153 = vmatpush1.bf16.xpose.msra.mxu0 0
        %154 = vmatprep.subr.bf16.mxu0 0
        %155 = vmatpush1.bf16.xpose.msra.mxu0 0
        %156 = vmatprep.subr.bf16.mxu0 0
        %157 = vmatpush1.bf16.xpose.msra.mxu0 0
        %158 = vmatprep.subr.bf16.mxu0 0
        %159 = vmatpush1.bf16.xpose.msra.mxu0 0
        %160 = vmatprep.subr.bf16.mxu0 0
        %161 = vmatpush1.bf16.xpose.msra.mxu0 0
        %162 = vmatprep.subr.bf16.mxu0 0
        %163 = vmatpush1.bf16.xpose.msra.mxu0 0
        %164 = vmatprep.subr.bf16.mxu0 0
        %165 = vmatpush1.bf16.xpose.msra.mxu0 0
        %166 = vmatprep.subr.bf16.mxu0 0
        %167 = vmatpush1.bf16.xpose.msra.mxu0 0
        %168 = vmatprep.subr.bf16.mxu0 0
        %169 = vmatpush1.bf16.xpose.msra.mxu0 0
        %170 = vmatprep.subr.bf16.mxu0 0
        %171 = vmatpush1.bf16.xpose.msra.mxu0 0
        %172 = vmatprep.subr.bf16.mxu0 0
        %173 = vmatpush1.bf16.xpose.msra.mxu0 0
        %174 = vmatprep.subr.bf16.mxu0 0
        %175 = vmatpush1.bf16.xpose.msra.mxu0 0
        %176 = vmatprep.mubr.bf16.mxu0 0
        %177 = vmatmul.mubr.bf16.gmra.mrb[0].mxu0 %v87
        %v178 = vpop.f32.mrb[0].mxu0
        %v179 = vadd.f32 0.0, %v178
        %v180 = vpop.f32.mrb[0].mxu0
        %v181 = vpop.f32.mrb[0].mxu0
        %v182 = vadd.f32 0.0, %v181
        %v183 = vpop.f32.mrb[0].mxu0
        %184 = vdwg.mxu0
        %v185 = vmul.f32 %v179, 2.0
        %v186 = vmul.f32 %v182, 2.0
        %v188 = vsel %vm85, %v80, 0
        %190 = vmatprep.subr.bf16.mxu0 0
        %191 = vmatpush1.bf16.xpose.msra.mxu0 %v90
        %192 = vmatprep.subr.bf16.mxu0 0
        %193 = vmatpush1.bf16.xpose.msra.mxu0 %v93
        %194 = vmatprep.subr.bf16.mxu0 0
        %195 = vmatpush1.bf16.xpose.msra.mxu0 0
        %196 = vmatprep.subr.bf16.mxu0 0
        %197 = vmatpush1.bf16.xpose.msra.mxu0 0
        %198 = vmatprep.subr.bf16.mxu0 0
        %199 = vmatpush1.bf16.xpose.msra.mxu0 0
        %200 = vmatprep.subr.bf16.mxu0 0
        %201 = vmatpush1.bf16.xpose.msra.mxu0 0
        %202 = vmatprep.subr.bf16.mxu0 0
        %203 = vmatpush1.bf16.xpose.msra.mxu0 0
        %204 = vmatprep.subr.bf16.mxu0 0
        %205 = vmatpush1.bf16.xpose.msra.mxu0 0
        %206 = vmatprep.subr.bf16.mxu0 0
        %207 = vmatpush1.bf16.xpose.msra.mxu0 0
        %208 = vmatprep.subr.bf16.mxu0 0
        %209 = vmatpush1.bf16.xpose.msra.mxu0 0
        %210 = vmatprep.subr.bf16.mxu0 0
        %211 = vmatpush1.bf16.xpose.msra.mxu0 0
        %212 = vmatprep.subr.bf16.mxu0 0
        %213 = vmatpush1.bf16.xpose.msra.mxu0 0
        %214 = vmatprep.subr.bf16.mxu0 0
        %215 = vmatpush1.bf16.xpose.msra.mxu0 0
        %216 = vmatprep.subr.bf16.mxu0 0
        %217 = vmatpush1.bf16.xpose.msra.mxu0 0
        %218 = vmatprep.subr.bf16.mxu0 0
        %219 = vmatpush1.bf16.xpose.msra.mxu0 0
        %220 = vmatprep.subr.bf16.mxu0 0
        %221 = vmatpush1.bf16.xpose.msra.mxu0 0
        %222 = vmatprep.mubr.bf16.mxu0 0
        %223 = vmatmul.mubr.bf16.gmra.mrb[0].mxu0 %v188
        %v224 = vpop.f32.mrb[0].mxu0
        %v225 = vadd.f32 0.0, %v224
        %v226 = vpop.f32.mrb[0].mxu0
        %v227 = vpop.f32.mrb[0].mxu0
        %v228 = vadd.f32 0.0, %v227
        %v229 = vpop.f32.mrb[0].mxu0
        %230 = vdwg.mxu0
        %v231 = vmul.f32 %v225, 2.0
        %v232 = vmul.f32 %v228, 2.0
        %233 = vmatprep.subr.bf16.mxu0 0
        %234 = vmatpush1.bf16.xpose.msra.mxu0 %v139
        %235 = vmatprep.subr.bf16.mxu0 0
        %236 = vmatpush1.bf16.xpose.msra.mxu0 %v142
        %237 = vmatprep.subr.bf16.mxu0 0
        %238 = vmatpush1.bf16.xpose.msra.mxu0 0
        %239 = vmatprep.subr.bf16.mxu0 0
        %240 = vmatpush1.bf16.xpose.msra.mxu0 0
        %241 = vmatprep.subr.bf16.mxu0 0
        %242 = vmatpush1.bf16.xpose.msra.mxu0 0
        %243 = vmatprep.subr.bf16.mxu0 0
        %244 = vmatpush1.bf16.xpose.msra.mxu0 0
        %245 = vmatprep.subr.bf16.mxu0 0
        %246 = vmatpush1.bf16.xpose.msra.mxu0 0
        %247 = vmatprep.subr.bf16.mxu0 0
        %248 = vmatpush1.bf16.xpose.msra.mxu0 0
        %249 = vmatprep.subr.bf16.mxu0 0
        %250 = vmatpush1.bf16.xpose.msra.mxu0 0
        %251 = vmatprep.subr.bf16.mxu0 0
        %252 = vmatpush1.bf16.xpose.msra.mxu0 0
        %253 = vmatprep.subr.bf16.mxu0 0
        %254 = vmatpush1.bf16.xpose.msra.mxu0 0
        %255 = vmatprep.subr.bf16.mxu0 0
        %256 = vmatpush1.bf16.xpose.msra.mxu0 0
        %257 = vmatprep.subr.bf16.mxu0 0
        %258 = vmatpush1.bf16.xpose.msra.mxu0 0
        %259 = vmatprep.subr.bf16.mxu0 0
        %260 = vmatpush1.bf16.xpose.msra.mxu0 0
        %261 = vmatprep.subr.bf16.mxu0 0
        %262 = vmatpush1.bf16.xpose.msra.mxu0 0
        %263 = vmatprep.subr.bf16.mxu0 0
        %264 = vmatpush1.bf16.xpose.msra.mxu0 0
        %265 = vmatprep.mubr.bf16.mxu0 0
        %266 = vmatmul.mubr.bf16.gmra.mrb[0].mxu0 %v188
        %v267 = vpop.f32.mrb[0].mxu0
        %v268 = vadd.f32 0.0, %v267
        %v269 = vpop.f32.mrb[0].mxu0
        %v270 = vpop.f32.mrb[0].mxu0
        %v271 = vadd.f32 0.0, %v270
        %v272 = vpop.f32.mrb[0].mxu0
        %273 = vdwg.mxu0
        %v274 = vmul.f32 %v268, 2.0
        %v275 = vmul.f32 %v271, 2.0
        %v276 = vlaneseq
        %v277 = vand.u32 %v276, 127
        %v278 = vlaneseq
        %v279 = vshrl.u32 %v278, 7
        %v280 = vadd.s32 %v279, 8
        %v281 = vstv %s72
        %v282 = vadd.s32 %v279, %v281
        %v283 = vadd.s32 %v280, %v281
        %vm284 = vcmp.eq.s32.totalorder %v282, %v277
        %vm285 = vcmp.eq.s32.totalorder %v283, %v277
        %v286 = vsel %vm284, -inf, %v185
        %v287 = vsel %vm285, -inf, %v186
        %v288 = vsel %vm284, -inf, %v231
        %v289 = vsel %vm285, -inf, %v232
        %v290 = vunpack.c.l.bf16 %v77
        %v291 = vunpack.c.h.bf16 %v77
        %v292 = vunpack.c.l.bf16 %v80
        %v293 = vunpack.c.h.bf16 %v80
        %v294 = vmul.f32 %v290, %v292
        %v295 = vmul.f32 %v291, %v293
        %v296 = vsel %vm85, %v294, 0.0
        %297 = vadd.xlane.f32.xlu0 %v296
        %v298 = vpop.xlane.xlu0 %297
        %v299 = vsel %vm85, %v295, 0.0
        %300 = vadd.xlane.f32.xlu0 %v299
        %v301 = vpop.xlane.xlu0 %300
        %v302 = vmul.f32 %v298, 2.0
        %v303 = vmul.f32 %v301, 2.0
        %vm304 = vcmask 261120
        %v305 = vsel %vm304, %v136, -inf
        %306 = vmax.xlane.f32.xlu0 %v305
        %v307 = vpop.xlane.xlu0 %306
        %v308 = vsel %vm304, %v137, -inf
        %309 = vmax.xlane.f32.xlu0 %v308
        %v310 = vpop.xlane.xlu0 %309
        %v311 = vsel %vm304, %v286, -inf
        %312 = vmax.xlane.f32.xlu0 %v311
        %v313 = vpop.xlane.xlu0 %312
        %v314 = vsel %vm304, %v287, -inf
        %315 = vmax.xlane.f32.xlu0 %v314
        %v316 = vpop.xlane.xlu0 %315
        %v317 = vmax.f32 %v307, %v313
        %v318 = vmax.f32 %v310, %v316
        %v319 = vsub.f32 %v136, %v317
        %v320 = vsub.f32 %v137, %v318
        %v321 = vmul.f32 %v319, 1.442695
        %v322 = vpow.pop %v321
        %v323 = vmul.f32 %v320, 1.442695
        %v324 = vpow.pop %v323
        %v325 = vsel %vm304, %v322, 0.0
        %326 = vadd.xlane.f32.xlu0 %v325
        %v327 = vpop.xlane.xlu0 %326
        %v328 = vsel %vm304, %v324, 0.0
        %329 = vadd.xlane.f32.xlu0 %v328
        %v330 = vpop.xlane.xlu0 %329
        %v331 = vsub.f32 %v286, %v317
        %v332 = vsub.f32 %v287, %v318
        %v333 = vmul.f32 %v331, 1.442695
        %v334 = vpow.pop %v333
        %v335 = vmul.f32 %v332, 1.442695
        %v336 = vpow.pop %v335
        %v337 = vsel %vm304, %v334, 0.0
        %338 = vadd.xlane.f32.xlu0 %v337
        %v339 = vpop.xlane.xlu0 %338
        %v340 = vsel %vm304, %v336, 0.0
        %341 = vadd.xlane.f32.xlu0 %v340
        %v342 = vpop.xlane.xlu0 %341
        %v343 = vadd.f32 %v327, %v339
        %v344 = vadd.f32 %v330, %v342
        %v345 = vlog2.pop %v343
        %v346 = vmul.f32 %v345, 0.6931472
        %v347 = vlog2.pop %v344
        %v348 = vmul.f32 %v347, 0.6931472
        %v349 = vadd.f32 %v317, %v346
        %v350 = vadd.f32 %v318, %v348
        %v351 = vsel %vm304, %v288, -inf
        %352 = vmax.xlane.f32.xlu0 %v351
        %v353 = vpop.xlane.xlu0 %352
        %v354 = vsel %vm304, %v289, -inf
        %355 = vmax.xlane.f32.xlu0 %v354
        %v356 = vpop.xlane.xlu0 %355
        %v357 = vsel %vm304, %v274, -inf
        %358 = vmax.xlane.f32.xlu0 %v357
        %v359 = vpop.xlane.xlu0 %358
        %v360 = vsel %vm304, %v275, -inf
        %361 = vmax.xlane.f32.xlu0 %v360
        %v362 = vpop.xlane.xlu0 %361
        %v363 = vmax.f32 %v353, %v359
        %v364 = vmax.f32 %v356, %v362
        %v365 = vsub.f32 %v288, %v363
        %v366 = vsub.f32 %v289, %v364
        %v367 = vmul.f32 %v365, 1.442695
        %v368 = vpow.pop %v367
        %v369 = vmul.f32 %v366, 1.442695
        %v370 = vpow.pop %v369
        %v371 = vsel %vm304, %v368, 0.0
        %372 = vadd.xlane.f32.xlu0 %v371
        %v373 = vpop.xlane.xlu0 %372
        %v374 = vsel %vm304, %v370, 0.0
        %375 = vadd.xlane.f32.xlu0 %v374
        %v376 = vpop.xlane.xlu0 %375
        %v377 = vsub.f32 %v274, %v363
        %v378 = vsub.f32 %v275, %v364
        %v379 = vmul.f32 %v377, 1.442695
        %v380 = vpow.pop %v379
        %v381 = vmul.f32 %v378, 1.442695
        %v382 = vpow.pop %v381
        %v383 = vsel %vm304, %v380, 0.0
        %384 = vadd.xlane.f32.xlu0 %v383
        %v385 = vpop.xlane.xlu0 %384
        %v386 = vsel %vm304, %v382, 0.0
        %387 = vadd.xlane.f32.xlu0 %v386
        %v388 = vpop.xlane.xlu0 %387
        %v389 = vadd.f32 %v373, %v385
        %v390 = vadd.f32 %v376, %v388
        %v391 = vlog2.pop %v389
        %v392 = vmul.f32 %v391, 0.6931472
        %v393 = vlog2.pop %v390
        %v394 = vmul.f32 %v393, 0.6931472
        %v395 = vadd.f32 %v363, %v392
        %v396 = vadd.f32 %v364, %v394
        %v397 = vsub.f32 %v349, %v302
        %v398 = vsub.f32 %v350, %v303
        %v399 = vsub.f32 %v395, %v302
        %v400 = vsub.f32 %v396, %v303
        %v401 = vadd.f32 %v397, %v399
        %v402 = vadd.f32 %v398, %v400
        %vm403 = vcmask 7168
        %v404 = vsel %vm403, %v401, 0.0
        %v405 = vsel %vm403, %v402, 0.0
        %v406 = vadd.f32 %v404, %v405
        %407 = vadd.xlane.f32.xlu0 %v406
        %v408 = vpop.xlane.xlu0 %407
        %v409 = vrot.slane %v408, 4
        %v410 = vadd.f32 %v408, %v409
        %v411 = vrot.slane %v410, 2
        %v412 = vadd.f32 %v410, %v411
        %v413 = vrot.slane %v412, 1
        %v414 = vadd.f32 %v412, %v413
        %s415 = vtos %v414
        %v416 = vstv %s415
        %v417 = vld [vmem:[#allocation5] sm:$0x1]
        %v418 = vmul.f32 %v416, 0.015625
        %v419 = vadd.f32 %v417, %v418
        %vm420 = vcmask 0
        %421 = vst.msk [vmem:[#allocation5] sm:$0x1] %vm420, %v419
        // Predicated region
        $region25: #{tpu_custom_call.1} parent=11 // pred_check
          %p422 = pneg %p19
        $region26: #{tpu_custom_call.1} parent=11 // pred_check_branch
          %424 = sbr.rel (%p422) target = $region28
        $region27: #{tpu_custom_call.1} parent=11 // pred_region
          %s426 = ssub.s32 16, 16
          %427 = vsyncadd [#allocation6], %s426
          %s429 = sshll.u32 [#allocation5], 4
          %s430 = int_to_ptr.vmem [resolvable:$true] %s429
          %432 = dma.vmem_to_hbm [thread:$0]  %s430, 16, %s2, [#allocation6]
        $region28: #{tpu_custom_call.1} parent=11 // pred_fallthru
          _
        // Predicated region
        $region29: #{tpu_custom_call.1} parent=11 // pred_check
          %p433 = pneg %p19
        $region30: #{tpu_custom_call.1} parent=11 // pred_check_branch
          %435 = sbr.rel (%p433) target = $region32
        $region31: #{tpu_custom_call.1} parent=11 // pred_region
          %436 = dma.done [#allocation6], 16
        $region32: #{tpu_custom_call.1} parent=11 // pred_fallthru
          _
      $region12: #{tpu_custom_call.1} parent=5 // pred_fallthru
        _
      %p437 = scmp.le.s32.totalorder 1, %s9
      // Predicated region
      $region33: #{tpu_custom_call.1} parent=5 // pred_check
        %p438 = pneg %p437
      $region34: #{tpu_custom_call.1} parent=5 // pred_check_branch
        %440 = sbr.rel (%p438) target = $region36
      $region35: #{tpu_custom_call.1} parent=5 // pred_region
        %s441 = ssub.s32 %s9, 1
      $region36: #{tpu_custom_call.1} parent=5 // pred_fallthru
        _
    $region6: #{tpu_custom_call.1} parent=1 // loop_footer
      %s13 = sadd.s32 1, %s9
    $region7: #{tpu_custom_call.1} parent=1 // loop_footer_branch
      %8 = sbr.rel target = $region3
    $region8: #{tpu_custom_call.1} parent=1 // loop_exit
      _
    %442 = vsyncpa [#allocation6], 1
    %s443 = scalar_lea.sflag [#allocation6], 1
    %444 = vsyncpa %s443, 1
  %445 = vsyncmov [#allocation4]
  %s446 = vpop.sfrf %445
  %p447 = scmp.eq.s32.totalorder %s446, 0
  %p448 = pneg %p447
  %450 = shalt.err (%p448)
  %s451 = scalar_lea.sflag [#allocation4], 1
  %452 = vsyncmov %s451
  %s453 = vpop.sfrf %452
  %p454 = scmp.eq.s32.totalorder %s453, 0
  %p455 = pneg %p454
  %457 = shalt.err (%p455)

</llo_original>
